<compile_context>
chip_gen: v7x
topology: tpu7x:2x2x1
jax: 0.10.0
libtpu: 0.0.40
codegen_flags: <defaults>
</compile_context>

<pallas_src>
import functools
import math

import jax
import jax.numpy as jnp
from jax import lax
from jax.experimental import pallas as pl
from jax.experimental.pallas import tpu as pltpu

_LN2 = math.log(2.0)


def _gaussian_val(dist: int, sigma: int = 1) -> float:
    # NOTE: faithful to the PyTorch module: exp(-2**dist / (2 * 2**sigma))
    # (uses 2**dist, not dist**2 — quirk of the original module, kept as-is).
    return math.exp(-math.pow(2, dist) / (2 * math.pow(2, sigma)))


def _ce_gauss_kernel(target_ref, pred_ref, out_ref, *,
                     num_classes, blur_range, sigma, decays):
    # target_ref: (TN, 1) int32 ; pred_ref: (TN, C) float ; out_ref: (TN, 1) f32
    pred = pred_ref[...].astype(jnp.float32)            # (TN, C)
    tgt = target_ref[...]                                # (TN, 1) int32
    tn, c = pred.shape

    # --- log-softmax pieces (reductions stay on the XLU; exp/log on the EUP) ---
    m = jnp.max(pred, axis=-1, keepdims=True)            # (TN, 1)
    z = pred - m                                          # (TN, C)
    lse = jnp.log(jnp.sum(jnp.exp(z), axis=-1, keepdims=True))   # (TN, 1)

    # --- Gaussian-smoothed labels, closed "band" form ------------------------
    # Equivalent to the PyTorch clamp+scatter overwrite sequence:
    #   val[j] = 1.0                                   if j == tgt
    #          = exp(-2**|j-tgt| / (2*2**sigma))       if 0 < |j-tgt| <= blur_range
    #          = 0.0                                   otherwise
    # (Clamped boundary scatters always end with the smallest distance, which
    #  is exactly |j - tgt|, so the band form reproduces them exactly.)
    inv_denom = 1.0 / (2.0 * (2.0 ** sigma))
    cidx = lax.broadcasted_iota(jnp.int32, (tn, c), 1)
    absd = jnp.abs(cidx - tgt)                            # (TN, C) int32
    absd_f = jnp.minimum(absd, blur_range + 1).astype(jnp.float32)
    # 2**d via exp(d*ln2): both exps go to the EUP (separate VLIW slot).
    decay = jnp.exp(-jnp.exp(absd_f * _LN2) * inv_denom)  # (TN, C)
    band = jnp.where(absd == 0, jnp.float32(1.0), decay)
    val = jnp.where(absd <= blur_range, band, jnp.float32(0.0))

    # --- loss = lse * sum(val) - sum(z * val) --------------------------------
    szv = jnp.sum(z * val, axis=-1, keepdims=True)        # (TN, 1)

    # sum(val) analytically per row: 1 + sum_d decay[d] * (#valid directions).
    sum_val = jnp.ones_like(lse)                           # (TN, 1)
    for d in range(1, blur_range + 1):
        dec = jnp.float32(decays[d])
        plus_ok = (tgt <= num_classes - 1 - d).astype(jnp.float32)
        minus_ok = (tgt >= d).astype(jnp.float32)
        sum_val = sum_val + dec * (plus_ok + minus_ok)

    out_ref[...] = lse * sum_val - szv


def cross_entropy_with_gaussian_smoothed_labels(pred, target, *,
                                                num_classes=722, blur_range=3,
                                                sigma=1, row_tile=512):
    """pred: (B, T, num_classes) float (f32 or bf16); target: (B, T) int.
    Returns scalar f32 loss (mean over all B*T rows)."""
    b, t, c = pred.shape
    assert c == num_classes
    n = b * t

    pred2 = pred.reshape(n, c)
    tgt2 = target.reshape(n, 1).astype(jnp.int32)

    # Rarely needed: keep the row count a multiple of 8 so the row tile always
    # satisfies the (8, 128) sublane constraint. Padded rows are sliced off
    # before the mean.
    n_pad = n
    if n % 8 != 0:
        extra = (-n) % 8
        pred2 = jnp.pad(pred2, ((0, extra), (0, 0)))
        tgt2 = jnp.pad(tgt2, ((0, extra), (0, 0)))
        n_pad = n + extra

    # Largest tile <= requested (multiple of 8), without exceeding the array.
    rt = min(row_tile, n_pad)
    rt = max(8, (rt // 8) * 8)
    grid_len = pl.cdiv(n_pad, rt)

    decays = tuple(_gaussian_val(d, sigma) for d in range(blur_range + 1))
    kernel = functools.partial(_ce_gauss_kernel, num_classes=num_classes,
                               blur_range=blur_range, sigma=sigma, decays=decays)

    per_row = pl.pallas_call(
        kernel,
        grid=(grid_len,),
        in_specs=[
            pl.BlockSpec((rt, 1), lambda i: (i, 0)),   # target indices
            pl.BlockSpec((rt, c), lambda i: (i, 0)),   # logits
        ],
        out_specs=pl.BlockSpec((rt, 1), lambda i: (i, 0)),
        out_shape=jax.ShapeDtypeStruct((n_pad, 1), jnp.float32),
        compiler_params=pltpu.CompilerParams(
            dimension_semantics=("parallel",),          # shards across TCs on v7x
            vmem_limit_bytes=48 * 1024 * 1024),         # headroom; < v7x 64 MiB
    )(tgt2, pred2)

    # Tiny final reduction over B*T rows — plain JAX.
    return jnp.mean(per_row[:n])


# ---------------------------------------------------------------------------
# Pure-JAX reference: direct transcription of the PyTorch module (scatter
# overwrite order), used only for correctness checking.
def _reference_loss(pred, target, num_classes, blur_range, sigma=1):
    pred = pred.astype(jnp.float32)
    logp = jax.nn.log_softmax(pred, axis=-1)
    tgt = target[..., None].astype(jnp.int32)
    cidx = jnp.arange(num_classes, dtype=jnp.int32)
    val = jnp.zeros(pred.shape, jnp.float32)
    for dist in range(blur_range, -1, -1):
        dec = _gaussian_val(dist, sigma)
        for direction in (1, -1):
            bidx = jnp.clip(tgt + direction * dist, 0, num_classes - 1)
            val = jnp.where(cidx == bidx, jnp.float32(dec), val)
    val = jnp.where(cidx == tgt, jnp.float32(1.0), val)
    return jnp.mean(-(logp * val).sum(-1))


if __name__ == "__main__":
    key = jax.random.PRNGKey(0)
    k_pred, k_tgt, k_pred2, k_tgt2 = jax.random.split(key, 4)

    # Small demo shape consistent with the module defaults (num_classes=722).
    B, T, C = 2, 8, 722
    pred = jax.random.normal(k_pred, (B, T, C), dtype=jnp.float32)
    target = jax.random.randint(k_tgt, (B, T), 0, C, dtype=jnp.int32)

    loss = cross_entropy_with_gaussian_smoothed_labels(
        pred, target, num_classes=C, blur_range=3)
    loss = jax.block_until_ready(loss)
    assert loss.shape == () and bool(jnp.isfinite(loss))
    ref = _reference_loss(pred, target, C, 3)
    assert jnp.allclose(loss, ref, rtol=2e-4, atol=2e-4), (loss, ref)

    # Second run: multi-tile grid (n=2048, row_tile=512 -> 4 steps), with
    # boundary targets to exercise the clamp/overwrite semantics.
    B2, T2 = 2, 1024
    pred_b = jax.random.normal(k_pred2, (B2, T2, C), dtype=jnp.float32)
    target_b = jax.random.randint(k_tgt2, (B2, T2), 0, C, dtype=jnp.int32)
    target_b = target_b.at[0, :8].set(
        jnp.array([0, 1, 2, 3, C - 1, C - 2, C - 3, C - 4], jnp.int32))
    loss_b = jax.block_until_ready(
        cross_entropy_with_gaussian_smoothed_labels(
            pred_b, target_b, num_classes=C, blur_range=3))
    ref_b = _reference_loss(pred_b, target_b, C, 3)
    assert bool(jnp.isfinite(loss_b))
    assert jnp.allclose(loss_b, ref_b, rtol=2e-4, atol=2e-4), (loss_b, ref_b)

    print("KERNEL_OK")
</pallas_src>

<mosaic_0001>
module attributes {stable_mosaic.version = 11 : i64} {
  func.func @_ce_gauss_kernel(%arg0: i32, %arg1: memref<16x1xi32, #tpu.memory_space<vmem>>, %arg2: memref<16x722xf32, #tpu.memory_space<vmem>>, %arg3: memref<16x1xf32, #tpu.memory_space<vmem>>) attributes {dimension_semantics = [#tpu.dimension_semantics<parallel>], iteration_bounds = array<i64: 1>, scalar_prefetch = 0 : i64, scratch_operands = 0 : i64, tpu.core_type = #tpu.core_type<tc>, window_params = [{transform_indices = @transform_0, window_bounds = array<i64: 16, 1>}, {transform_indices = @transform_1, window_bounds = array<i64: 16, 722>}, {transform_indices = @transform_2, window_bounds = array<i64: 16, 1>}]} {
    %c0 = arith.constant 0 : index
    %c0_0 = arith.constant 0 : index
    %0 = vector.load %arg2[%c0, %c0_0] : memref<16x722xf32, #tpu.memory_space<vmem>>, vector<16x722xf32>
    %c0_1 = arith.constant 0 : index
    %c0_2 = arith.constant 0 : index
    %1 = vector.load %arg1[%c0_1, %c0_2] : memref<16x1xi32, #tpu.memory_space<vmem>>, vector<16x1xi32>
    %cst = arith.constant dense<0xFF800000> : vector<16xf32>
    %2 = vector.multi_reduction <maximumf>, %0, %cst [1] : vector<16x722xf32> to vector<16xf32>
    %3 = vector.shape_cast %2 : vector<16xf32> to vector<16x1xf32>
    %4 = vector.broadcast %3 : vector<16x1xf32> to vector<16x722xf32>
    %5 = arith.subf %0, %4 : vector<16x722xf32>
    %6 = math.exp %5 : vector<16x722xf32>
    %cst_3 = arith.constant dense<0.000000e+00> : vector<16xf32>
    %7 = vector.multi_reduction <add>, %6, %cst_3 [1] : vector<16x722xf32> to vector<16xf32>
    %8 = vector.shape_cast %7 : vector<16xf32> to vector<16x1xf32>
    %9 = math.log %8 : vector<16x1xf32>
    %10 = tpu.iota {dimensions = array<i32: 1>} : vector<16x722xi32>
    %11 = vector.broadcast %1 : vector<16x1xi32> to vector<16x722xi32>
    %12 = arith.subi %10, %11 : vector<16x722xi32>
    %13 = math.absi %12 : vector<16x722xi32>
    %c4_i32 = arith.constant 4 : i32
    %14 = vector.broadcast %c4_i32 : i32 to vector<16x722xi32>
    %15 = arith.minsi %13, %14 : vector<16x722xi32>
    %16 = arith.sitofp %15 : vector<16x722xi32> to vector<16x722xf32>
    %cst_4 = arith.constant 0.693147182 : f32
    %17 = vector.broadcast %cst_4 : f32 to vector<16x722xf32>
    %18 = arith.mulf %16, %17 : vector<16x722xf32>
    %19 = math.exp %18 : vector<16x722xf32>
    %cst_5 = arith.constant 0.000000e+00 : f32
    %20 = vector.broadcast %cst_5 : f32 to vector<16x722xf32>
    %21 = arith.subf %20, %19 : vector<16x722xf32>
    %cst_6 = arith.constant 2.500000e-01 : f32
    %22 = vector.broadcast %cst_6 : f32 to vector<16x722xf32>
    %23 = arith.mulf %21, %22 : vector<16x722xf32>
    %24 = math.exp %23 : vector<16x722xf32>
    %c0_i32 = arith.constant 0 : i32
    %25 = vector.broadcast %c0_i32 : i32 to vector<16x722xi32>
    %26 = arith.cmpi eq, %13, %25 : vector<16x722xi32>
    %cst_7 = arith.constant 1.000000e+00 : f32
    %27 = vector.broadcast %cst_7 : f32 to vector<16x722xf32>
    %28 = arith.select %26, %27, %24 : vector<16x722xi1>, vector<16x722xf32>
    %c3_i32 = arith.constant 3 : i32
    %29 = vector.broadcast %c3_i32 : i32 to vector<16x722xi32>
    %30 = arith.cmpi sle, %13, %29 : vector<16x722xi32>
    %cst_8 = arith.constant 0.000000e+00 : f32
    %31 = vector.broadcast %cst_8 : f32 to vector<16x722xf32>
    %32 = arith.select %30, %28, %31 : vector<16x722xi1>, vector<16x722xf32>
    %33 = arith.mulf %5, %32 : vector<16x722xf32>
    %cst_9 = arith.constant dense<0.000000e+00> : vector<16xf32>
    %34 = vector.multi_reduction <add>, %33, %cst_9 [1] : vector<16x722xf32> to vector<16xf32>
    %35 = vector.shape_cast %34 : vector<16xf32> to vector<16x1xf32>
    %cst_10 = arith.constant 1.000000e+00 : f32
    %36 = vector.broadcast %cst_10 : f32 to vector<16x1xf32>
    %c720_i32 = arith.constant 720 : i32
    %37 = vector.broadcast %c720_i32 : i32 to vector<16x1xi32>
    %38 = arith.cmpi sle, %1, %37 : vector<16x1xi32>
    %39 = arith.extui %38 : vector<16x1xi1> to vector<16x1xi32>
    %40 = arith.sitofp %39 : vector<16x1xi32> to vector<16x1xf32>
    %c1_i32 = arith.constant 1 : i32
    %41 = vector.broadcast %c1_i32 : i32 to vector<16x1xi32>
    %42 = arith.cmpi sge, %1, %41 : vector<16x1xi32>
    %43 = arith.extui %42 : vector<16x1xi1> to vector<16x1xi32>
    %44 = arith.sitofp %43 : vector<16x1xi32> to vector<16x1xf32>
    %45 = arith.addf %40, %44 : vector<16x1xf32>
    %cst_11 = arith.constant 0.606530666 : f32
    %46 = vector.broadcast %cst_11 : f32 to vector<16x1xf32>
    %47 = arith.mulf %46, %45 : vector<16x1xf32>
    %48 = arith.addf %36, %47 : vector<16x1xf32>
    %c719_i32 = arith.constant 719 : i32
    %49 = vector.broadcast %c719_i32 : i32 to vector<16x1xi32>
    %50 = arith.cmpi sle, %1, %49 : vector<16x1xi32>
    %51 = arith.extui %50 : vector<16x1xi1> to vector<16x1xi32>
    %52 = arith.sitofp %51 : vector<16x1xi32> to vector<16x1xf32>
    %c2_i32 = arith.constant 2 : i32
    %53 = vector.broadcast %c2_i32 : i32 to vector<16x1xi32>
    %54 = arith.cmpi sge, %1, %53 : vector<16x1xi32>
    %55 = arith.extui %54 : vector<16x1xi1> to vector<16x1xi32>
    %56 = arith.sitofp %55 : vector<16x1xi32> to vector<16x1xf32>
    %57 = arith.addf %52, %56 : vector<16x1xf32>
    %cst_12 = arith.constant 0.36787945 : f32
    %58 = vector.broadcast %cst_12 : f32 to vector<16x1xf32>
    %59 = arith.mulf %58, %57 : vector<16x1xf32>
    %60 = arith.addf %48, %59 : vector<16x1xf32>
    %c718_i32 = arith.constant 718 : i32
    %61 = vector.broadcast %c718_i32 : i32 to vector<16x1xi32>
    %62 = arith.cmpi sle, %1, %61 : vector<16x1xi32>
    %63 = arith.extui %62 : vector<16x1xi1> to vector<16x1xi32>
    %64 = arith.sitofp %63 : vector<16x1xi32> to vector<16x1xf32>
    %c3_i32_13 = arith.constant 3 : i32
    %65 = vector.broadcast %c3_i32_13 : i32 to vector<16x1xi32>
    %66 = arith.cmpi sge, %1, %65 : vector<16x1xi32>
    %67 = arith.extui %66 : vector<16x1xi1> to vector<16x1xi32>
    %68 = arith.sitofp %67 : vector<16x1xi32> to vector<16x1xf32>
    %69 = arith.addf %64, %68 : vector<16x1xf32>
    %cst_14 = arith.constant 0.135335281 : f32
    %70 = vector.broadcast %cst_14 : f32 to vector<16x1xf32>
    %71 = arith.mulf %70, %69 : vector<16x1xf32>
    %72 = arith.addf %60, %71 : vector<16x1xf32>
    %73 = arith.mulf %9, %72 : vector<16x1xf32>
    %74 = arith.subf %73, %35 : vector<16x1xf32>
    %c0_15 = arith.constant 0 : index
    %c0_16 = arith.constant 0 : index
    %75 = vector.load %arg3[%c0_15, %c0_16] : memref<16x1xf32, #tpu.memory_space<vmem>>, vector<16x1xf32>
    tpu.vector_store %arg3[%c0_15, %c0_16], %74 {strides = array<i32>} : memref<16x1xf32, #tpu.memory_space<vmem>>, vector<16x1xf32>,
    return
  }
  func.func @transform_0(%arg0: i32) -> (i32, i32) {
    %c0_i32 = arith.constant 0 : i32
    %c0_i32_0 = arith.constant 0 : i32
    return %arg0, %c0_i32 : i32, i32
  }
  func.func @transform_1(%arg0: i32) -> (i32, i32) {
    %c0_i32 = arith.constant 0 : i32
    %c0_i32_0 = arith.constant 0 : i32
    return %arg0, %c0_i32 : i32, i32
  }
  func.func @transform_2(%arg0: i32) -> (i32, i32) {
    %c0_i32 = arith.constant 0 : i32
    %c0_i32_0 = arith.constant 0 : i32
    return %arg0, %c0_i32 : i32, i32
  }
}

</mosaic_0001>

<llo_original>
// kernel: tpu_custom_call.1
$region0: #{tpu_custom_call.1}
  #allocation0 [shape = 'u32[]', space=smem, size = 0x4, offset = 0x4, fixed_abs, tag = 'smem constant byte address 0x4 - core index']
  #allocation1 [shape = 'u32[144,128]{1,0:T(1,128)}', space=vmem, size = 0x12000, scoped, tag = 'internal scratch']
  %s0 = inlined_call_operand.vmem [shape: s32[16,1], index: 0, kind: input, shape index: {}]
  %s1 = inlined_call_operand.hbm [shape: f32[16,722], index: 1, kind: input, shape index: {}]
  %s2 = inlined_call_operand.vmem [shape: f32[16,1], index: 2, kind: output, shape index: {}]
  %s3 = sld [smem:[#allocation0]]
  $region22: #{tpu_custom_call.1} parent=0
    _
  %s5 = ssub.s32 1, %s3
  %s6 = scalar_select 0, %s5, %s3
  $region1: #{tpu_custom_call.1} parent=0
    #allocation2 [shape = 'u8[49152]{0}', space=vmem, size = 0xc000, scoped, tag = 'input window, operand 1, single buffered']
    #allocation3 [shape = 's32[1]{0}', space=sflag, size = 0x4, scoped, tag = 'scoped memory for tpu_custom_call.1']
    %7 = vsyncpa [#allocation3], 0
    // Predicated region
    $region2: #{tpu_custom_call.1} parent=1 // pred_check
      _
    $region3: #{tpu_custom_call.1} parent=1 // pred_check_branch
      %9 = sbr.rel (0) target = $region5
    $region4: #{tpu_custom_call.1} parent=1 // pred_region
      _
    $region5: #{tpu_custom_call.1} parent=1 // pred_fallthru
      _
    // Predicated region
    $region6: #{tpu_custom_call.1} parent=1 // pred_check
      _
    $region7: #{tpu_custom_call.1} parent=1 // pred_check_branch
      %11 = sbr.rel (0) target = $region9
    $region8: #{tpu_custom_call.1} parent=1 // pred_region
      %s13 = ssub.s32 1536, 1536
      %14 = vsyncadd [#allocation3], %s13
      %s15 = sshll.u32 [#allocation2], 4
      %s16 = int_to_ptr.vmem [resolvable:$true] %s15
      %21 = dma.hbm_to_vmem [thread:$0]  %s1, 1536, %s16, [#allocation3], 768, 768, 48
    $region9: #{tpu_custom_call.1} parent=1 // pred_fallthru
      _
    // Predicated region
    $region10: #{tpu_custom_call.1} parent=1 // pred_check
      _
    $region11: #{tpu_custom_call.1} parent=1 // pred_check_branch
      %23 = sbr.rel (0) target = $region13
    $region12: #{tpu_custom_call.1} parent=1 // pred_region
      %24 = dma.done [#allocation3], 1536
    $region13: #{tpu_custom_call.1} parent=1 // pred_fallthru
      _
    %v25 = vld [vmem:[#allocation2] sm:$0xff]
    %v26 = vld [vmem:[#allocation2 + $0x8] sm:$0xff]
    %v27 = vld [vmem:[#allocation2 + $0x10] sm:$0xff]
    %v28 = vld [vmem:[#allocation2 + $0x18] sm:$0xff]
    %v29 = vld [vmem:[#allocation2 + $0x20] sm:$0xff]
    %v30 = vld [vmem:[#allocation2 + $0x28] sm:$0xff]
    %v31 = vld [vmem:[#allocation2 + $0x30] sm:$0xff]
    %v32 = vld [vmem:[#allocation2 + $0x38] sm:$0xff]
    %v33 = vld [vmem:[#allocation2 + $0x40] sm:$0xff]
    %v34 = vld [vmem:[#allocation2 + $0x48] sm:$0xff]
    %v35 = vld [vmem:[#allocation2 + $0x50] sm:$0xff]
    %v36 = vld [vmem:[#allocation2 + $0x58] sm:$0xff]
    %v37 = vld [vmem:[%s0] sm:$0xff]
    %v38 = vld [vmem:[%s0 + $0x8] sm:$0xff]
    %v39 = vmax.f32 %v25, %v27
    %v40 = vmax.f32 %v26, %v28
    %v41 = vmax.f32 %v39, %v29
    %vm42 = vcmask 670720
    %v43 = vsel %vm42, %v30, -inf
    %v44 = vmax.f32 %v40, %v43
    %v45 = vmax.f32 %v41, %v44
    %46 = vmax.xlane.f32.xlu0 %v45
    %v47 = vpop.xlane.xlu0 %46
    %v48 = vmax.f32 %v31, %v33
    %v49 = vmax.f32 %v32, %v34
    %v50 = vmax.f32 %v48, %v35
    %v51 = vsel %vm42, %v36, -inf
    %v52 = vmax.f32 %v49, %v51
    %v53 = vmax.f32 %v50, %v52
    %54 = vmax.xlane.f32.xlu0 %v53
    %v55 = vpop.xlane.xlu0 %54
    %v56 = vsub.f32 %v25, %v47
    %v57 = vsub.f32 %v26, %v47
    %v58 = vsub.f32 %v27, %v47
    %v59 = vsub.f32 %v28, %v47
    %v60 = vsub.f32 %v29, %v47
    %v61 = vsub.f32 %v30, %v47
    %v62 = vsub.f32 %v31, %v55
    %v63 = vsub.f32 %v32, %v55
    %v64 = vsub.f32 %v33, %v55
    %v65 = vsub.f32 %v34, %v55
    %v66 = vsub.f32 %v35, %v55
    %v67 = vsub.f32 %v36, %v55
    %v68 = vmul.f32 %v56, 1.442695
    %v69 = vpow.pop %v68
    %v70 = vmul.f32 %v57, 1.442695
    %v71 = vpow.pop %v70
    %v72 = vmul.f32 %v58, 1.442695
    %v73 = vpow.pop %v72
    %v74 = vmul.f32 %v59, 1.442695
    %v75 = vpow.pop %v74
    %v76 = vmul.f32 %v60, 1.442695
    %v77 = vpow.pop %v76
    %v78 = vmul.f32 %v61, 1.442695
    %v79 = vpow.pop %v78
    %v80 = vmul.f32 %v62, 1.442695
    %v81 = vpow.pop %v80
    %v82 = vmul.f32 %v63, 1.442695
    %v83 = vpow.pop %v82
    %v84 = vmul.f32 %v64, 1.442695
    %v85 = vpow.pop %v84
    %v86 = vmul.f32 %v65, 1.442695
    %v87 = vpow.pop %v86
    %v88 = vmul.f32 %v66, 1.442695
    %v89 = vpow.pop %v88
    %v90 = vmul.f32 %v67, 1.442695
    %v91 = vpow.pop %v90
    %v92 = vadd.f32 %v69, %v71
    %v93 = vadd.f32 %v92, %v73
    %v94 = vadd.f32 %v93, %v75
    %v95 = vadd.f32 %v94, %v77
    %v96 = vsel %vm42, %v79, 0.0
    %v97 = vadd.f32 %v95, %v96
    %98 = vadd.xlane.f32.xlu0 %v97
    %v99 = vpop.xlane.xlu0 %98
    %v100 = vadd.f32 %v81, %v83
    %v101 = vadd.f32 %v100, %v85
    %v102 = vadd.f32 %v101, %v87
    %v103 = vadd.f32 %v102, %v89
    %v104 = vsel %vm42, %v91, 0.0
    %v105 = vadd.f32 %v103, %v104
    %106 = vadd.xlane.f32.xlu0 %v105
    %v107 = vpop.xlane.xlu0 %106
    %v108 = vlog2.pop %v99
    %v109 = vmul.f32 %v108, 0.6931472
    %v110 = vlog2.pop %v107
    %v111 = vmul.f32 %v110, 0.6931472
    %v112 = vlaneseq
    %v113 = vand.u32 %v112, 127
    %v114 = vadd.s32 %v113, 128
    %v115 = vadd.s32 %v113, 256
    %v116 = vadd.s32 %v113, 384
    %v117 = vadd.s32 %v113, 512
    %v118 = vadd.s32 %v113, 640
    %119 = vset.pattern.permute.xlu0 0
    %120 = vperm.xlu0 %119, %v37
    %v121 = vpop.permute.xlu0 %120
    %122 = vset.pattern.permute.xlu0 0
    %123 = vperm.xlu0 %122, %v38
    %v124 = vpop.permute.xlu0 %123
    %v125 = vsub.s32 %v113, %v121
    %v126 = vsub.s32 %v114, %v121
    %v127 = vsub.s32 %v115, %v121
    %v128 = vsub.s32 %v116, %v121
    %v129 = vsub.s32 %v117, %v121
    %v130 = vsub.s32 %v118, %v121
    %v131 = vsub.s32 %v113, %v124
    %v132 = vsub.s32 %v114, %v124
    %v133 = vsub.s32 %v115, %v124
    %v134 = vsub.s32 %v116, %v124
    %v135 = vsub.s32 %v117, %v124
    %v136 = vsub.s32 %v118, %v124
    %vm137 = vcmp.lt.s32.totalorder %v125, 0
    %v138 = vsub.s32 0, %v125
    %v139 = vsel %vm137, %v138, %v125
    %vm140 = vcmp.lt.s32.totalorder %v126, 0
    %v141 = vsub.s32 0, %v126
    %v142 = vsel %vm140, %v141, %v126
    %vm143 = vcmp.lt.s32.totalorder %v127, 0
    %v144 = vsub.s32 0, %v127
    %v145 = vsel %vm143, %v144, %v127
    %vm146 = vcmp.lt.s32.totalorder %v128, 0
    %v147 = vsub.s32 0, %v128
    %v148 = vsel %vm146, %v147, %v128
    %vm149 = vcmp.lt.s32.totalorder %v129, 0
    %v150 = vsub.s32 0, %v129
    %v151 = vsel %vm149, %v150, %v129
    %vm152 = vcmp.lt.s32.totalorder %v130, 0
    %v153 = vsub.s32 0, %v130
    %v154 = vsel %vm152, %v153, %v130
    %vm155 = vcmp.lt.s32.totalorder %v131, 0
    %v156 = vsub.s32 0, %v131
    %v157 = vsel %vm155, %v156, %v131
    %vm158 = vcmp.lt.s32.totalorder %v132, 0
    %v159 = vsub.s32 0, %v132
    %v160 = vsel %vm158, %v159, %v132
    %vm161 = vcmp.lt.s32.totalorder %v133, 0
    %v162 = vsub.s32 0, %v133
    %v163 = vsel %vm161, %v162, %v133
    %vm164 = vcmp.lt.s32.totalorder %v134, 0
    %v165 = vsub.s32 0, %v134
    %v166 = vsel %vm164, %v165, %v134
    %vm167 = vcmp.lt.s32.totalorder %v135, 0
    %v168 = vsub.s32 0, %v135
    %v169 = vsel %vm167, %v168, %v135
    %vm170 = vcmp.lt.s32.totalorder %v136, 0
    %v171 = vsub.s32 0, %v136
    %v172 = vsel %vm170, %v171, %v136
    %vm173 = vcmp.lt.s32.totalorder %v139, 4
    %v174 = vsel %vm173, %v139, 4
    %vm175 = vcmp.lt.s32.totalorder %v142, 4
    %v176 = vsel %vm175, %v142, 4
    %vm177 = vcmp.lt.s32.totalorder %v145, 4
    %v178 = vsel %vm177, %v145, 4
    %vm179 = vcmp.lt.s32.totalorder %v148, 4
    %v180 = vsel %vm179, %v148, 4
    %vm181 = vcmp.lt.s32.totalorder %v151, 4
    %v182 = vsel %vm181, %v151, 4
    %vm183 = vcmp.lt.s32.totalorder %v154, 4
    %v184 = vsel %vm183, %v154, 4
    %vm185 = vcmp.lt.s32.totalorder %v157, 4
    %v186 = vsel %vm185, %v157, 4
    %vm187 = vcmp.lt.s32.totalorder %v160, 4
    %v188 = vsel %vm187, %v160, 4
    %vm189 = vcmp.lt.s32.totalorder %v163, 4
    %v190 = vsel %vm189, %v163, 4
    %vm191 = vcmp.lt.s32.totalorder %v166, 4
    %v192 = vsel %vm191, %v166, 4
    %vm193 = vcmp.lt.s32.totalorder %v169, 4
    %v194 = vsel %vm193, %v169, 4
    %vm195 = vcmp.lt.s32.totalorder %v172, 4
    %v196 = vsel %vm195, %v172, 4
    %v197 = vcvt.s32.f32 %v174
    %v198 = vcvt.s32.f32 %v176
    %v199 = vcvt.s32.f32 %v178
    %v200 = vcvt.s32.f32 %v180
    %v201 = vcvt.s32.f32 %v182
    %v202 = vcvt.s32.f32 %v184
    %v203 = vcvt.s32.f32 %v186
    %v204 = vcvt.s32.f32 %v188
    %v205 = vcvt.s32.f32 %v190
    %v206 = vcvt.s32.f32 %v192
    %v207 = vcvt.s32.f32 %v194
    %v208 = vcvt.s32.f32 %v196
    %v209 = vmul.f32 %v197, 0.6931472
    %v210 = vmul.f32 %v198, 0.6931472
    %v211 = vmul.f32 %v199, 0.6931472
    %v212 = vmul.f32 %v200, 0.6931472
    %v213 = vmul.f32 %v201, 0.6931472
    %v214 = vmul.f32 %v202, 0.6931472
    %v215 = vmul.f32 %v203, 0.6931472
    %v216 = vmul.f32 %v204, 0.6931472
    %v217 = vmul.f32 %v205, 0.6931472
    %v218 = vmul.f32 %v206, 0.6931472
    %v219 = vmul.f32 %v207, 0.6931472
    %v220 = vmul.f32 %v208, 0.6931472
    %v221 = vmul.f32 %v209, 1.442695
    %v222 = vpow.pop %v221
    %v223 = vmul.f32 %v210, 1.442695
    %v224 = vpow.pop %v223
    %v225 = vmul.f32 %v211, 1.442695
    %v226 = vpow.pop %v225
    %v227 = vmul.f32 %v212, 1.442695
    %v228 = vpow.pop %v227
    %v229 = vmul.f32 %v213, 1.442695
    %v230 = vpow.pop %v229
    %v231 = vmul.f32 %v214, 1.442695
    %v232 = vpow.pop %v231
    %v233 = vmul.f32 %v215, 1.442695
    %v234 = vpow.pop %v233
    %v235 = vmul.f32 %v216, 1.442695
    %v236 = vpow.pop %v235
    %v237 = vmul.f32 %v217, 1.442695
    %v238 = vpow.pop %v237
    %v239 = vmul.f32 %v218, 1.442695
    %v240 = vpow.pop %v239
    %v241 = vmul.f32 %v219, 1.442695
    %v242 = vpow.pop %v241
    %v243 = vmul.f32 %v220, 1.442695
    %v244 = vpow.pop %v243
    %v245 = vsub.f32 0.0, %v222
    %v246 = vsub.f32 0.0, %v224
    %v247 = vsub.f32 0.0, %v226
    %v248 = vsub.f32 0.0, %v228
    %v249 = vsub.f32 0.0, %v230
    %v250 = vsub.f32 0.0, %v232
    %v251 = vsub.f32 0.0, %v234
    %v252 = vsub.f32 0.0, %v236
    %v253 = vsub.f32 0.0, %v238
    %v254 = vsub.f32 0.0, %v240
    %v255 = vsub.f32 0.0, %v242
    %v256 = vsub.f32 0.0, %v244
    %v257 = vmul.f32 %v245, 0.25
    %v258 = vmul.f32 %v246, 0.25
    %v259 = vmul.f32 %v247, 0.25
    %v260 = vmul.f32 %v248, 0.25
    %v261 = vmul.f32 %v249, 0.25
    %v262 = vmul.f32 %v250, 0.25
    %v263 = vmul.f32 %v251, 0.25
    %v264 = vmul.f32 %v252, 0.25
    %v265 = vmul.f32 %v253, 0.25
    %v266 = vmul.f32 %v254, 0.25
    %v267 = vmul.f32 %v255, 0.25
    %v268 = vmul.f32 %v256, 0.25
    %v269 = vmul.f32 %v257, 1.442695
    %v270 = vpow.pop %v269
    %v271 = vmul.f32 %v258, 1.442695
    %v272 = vpow.pop %v271
    %v273 = vmul.f32 %v259, 1.442695
    %v274 = vpow.pop %v273
    %v275 = vmul.f32 %v260, 1.442695
    %v276 = vpow.pop %v275
    %v277 = vmul.f32 %v261, 1.442695
    %v278 = vpow.pop %v277
    %v279 = vmul.f32 %v262, 1.442695
    %v280 = vpow.pop %v279
    %v281 = vmul.f32 %v263, 1.442695
    %v282 = vpow.pop %v281
    %v283 = vmul.f32 %v264, 1.442695
    %v284 = vpow.pop %v283
    %v285 = vmul.f32 %v265, 1.442695
    %v286 = vpow.pop %v285
    %v287 = vmul.f32 %v266, 1.442695
    %v288 = vpow.pop %v287
    %v289 = vmul.f32 %v267, 1.442695
    %v290 = vpow.pop %v289
    %v291 = vmul.f32 %v268, 1.442695
    %v292 = vpow.pop %v291
    %vm293 = vcmp.eq.s32.totalorder %v139, 0
    %vm294 = vcmp.eq.s32.totalorder %v142, 0
    %vm295 = vcmp.eq.s32.totalorder %v145, 0
    %vm296 = vcmp.eq.s32.totalorder %v148, 0
    %vm297 = vcmp.eq.s32.totalorder %v151, 0
    %vm298 = vcmp.eq.s32.totalorder %v154, 0
    %vm299 = vcmp.eq.s32.totalorder %v157, 0
    %vm300 = vcmp.eq.s32.totalorder %v160, 0
    %vm301 = vcmp.eq.s32.totalorder %v163, 0
    %vm302 = vcmp.eq.s32.totalorder %v166, 0
    %vm303 = vcmp.eq.s32.totalorder %v169, 0
    %vm304 = vcmp.eq.s32.totalorder %v172, 0
    %v305 = vsel %vm293, 1.0, %v270
    %v306 = vsel %vm294, 1.0, %v272
    %v307 = vsel %vm295, 1.0, %v274
    %v308 = vsel %vm296, 1.0, %v276
    %v309 = vsel %vm297, 1.0, %v278
    %v310 = vsel %vm298, 1.0, %v280
    %v311 = vsel %vm299, 1.0, %v282
    %v312 = vsel %vm300, 1.0, %v284
    %v313 = vsel %vm301, 1.0, %v286
    %v314 = vsel %vm302, 1.0, %v288
    %v315 = vsel %vm303, 1.0, %v290
    %v316 = vsel %vm304, 1.0, %v292
    %vm317 = vcmp.le.s32.totalorder %v139, 3
    %vm318 = vcmp.le.s32.totalorder %v142, 3
    %vm319 = vcmp.le.s32.totalorder %v145, 3
    %vm320 = vcmp.le.s32.totalorder %v148, 3
    %vm321 = vcmp.le.s32.totalorder %v151, 3
    %vm322 = vcmp.le.s32.totalorder %v154, 3
    %vm323 = vcmp.le.s32.totalorder %v157, 3
    %vm324 = vcmp.le.s32.totalorder %v160, 3
    %vm325 = vcmp.le.s32.totalorder %v163, 3
    %vm326 = vcmp.le.s32.totalorder %v166, 3
    %vm327 = vcmp.le.s32.totalorder %v169, 3
    %vm328 = vcmp.le.s32.totalorder %v172, 3
    %v329 = vsel %vm317, %v305, 0.0
    %v330 = vsel %vm318, %v306, 0.0
    %v331 = vsel %vm319, %v307, 0.0
    %v332 = vsel %vm320, %v308, 0.0
    %v333 = vsel %vm321, %v309, 0.0
    %v334 = vsel %vm322, %v310, 0.0
    %v335 = vsel %vm323, %v311, 0.0
    %v336 = vsel %vm324, %v312, 0.0
    %v337 = vsel %vm325, %v313, 0.0
    %v338 = vsel %vm326, %v314, 0.0
    %v339 = vsel %vm327, %v315, 0.0
    %v340 = vsel %vm328, %v316, 0.0
    %v341 = vmul.f32 %v56, %v329
    %v342 = vmul.f32 %v57, %v330
    %v343 = vmul.f32 %v58, %v331
    %v344 = vmul.f32 %v59, %v332
    %v345 = vmul.f32 %v60, %v333
    %v346 = vmul.f32 %v61, %v334
    %v347 = vmul.f32 %v62, %v335
    %v348 = vmul.f32 %v63, %v336
    %v349 = vmul.f32 %v64, %v337
    %v350 = vmul.f32 %v65, %v338
    %v351 = vmul.f32 %v66, %v339
    %v352 = vmul.f32 %v67, %v340
    %v353 = vadd.f32 %v341, %v342
    %v354 = vadd.f32 %v353, %v343
    %v355 = vadd.f32 %v354, %v344
    %v356 = vadd.f32 %v355, %v345
    %v357 = vsel %vm42, %v346, 0.0
    %v358 = vadd.f32 %v356, %v357
    %359 = vadd.xlane.f32.xlu0 %v358
    %v360 = vpop.xlane.xlu0 %359
    %v361 = vadd.f32 %v347, %v348
    %v362 = vadd.f32 %v361, %v349
    %v363 = vadd.f32 %v362, %v350
    %v364 = vadd.f32 %v363, %v351
    %v365 = vsel %vm42, %v352, 0.0
    %v366 = vadd.f32 %v364, %v365
    %367 = vadd.xlane.f32.xlu0 %v366
    %v368 = vpop.xlane.xlu0 %367
    %vm369 = vcmp.le.s32.totalorder %v37, 720
    %vm370 = vcmp.le.s32.totalorder %v38, 720
    %v371 = vsel %vm369, 1, 0
    %v372 = vsel %vm370, 1, 0
    %v373 = vcvt.s32.f32 %v371
    %v374 = vcvt.s32.f32 %v372
    %vm375 = vcmp.ge.s32.totalorder %v37, 1
    %vm376 = vcmp.ge.s32.totalorder %v38, 1
    %v377 = vsel %vm375, 1, 0
    %v378 = vsel %vm376, 1, 0
    %v379 = vcvt.s32.f32 %v377
    %v380 = vcvt.s32.f32 %v378
    %v381 = vadd.f32 %v373, %v379
    %v382 = vadd.f32 %v374, %v380
    %v383 = vmul.f32 %v381, 0.60653067
    %v384 = vmul.f32 %v382, 0.60653067
    %v385 = vadd.f32 %v383, 1.0
    %v386 = vadd.f32 %v384, 1.0
    %vm387 = vcmp.le.s32.totalorder %v37, 719
    %vm388 = vcmp.le.s32.totalorder %v38, 719
    %v389 = vsel %vm387, 1, 0
    %v390 = vsel %vm388, 1, 0
    %v391 = vcvt.s32.f32 %v389
    %v392 = vcvt.s32.f32 %v390
    %vm393 = vcmp.ge.s32.totalorder %v37, 2
    %vm394 = vcmp.ge.s32.totalorder %v38, 2
    %v395 = vsel %vm393, 1, 0
    %v396 = vsel %vm394, 1, 0
    %v397 = vcvt.s32.f32 %v395
    %v398 = vcvt.s32.f32 %v396
    %v399 = vadd.f32 %v391, %v397
    %v400 = vadd.f32 %v392, %v398
    %v401 = vmul.f32 %v399, 0.36787945
    %v402 = vmul.f32 %v400, 0.36787945
    %v403 = vadd.f32 %v385, %v401
    %v404 = vadd.f32 %v386, %v402
    %vm405 = vcmp.le.s32.totalorder %v37, 718
    %vm406 = vcmp.le.s32.totalorder %v38, 718
    %v407 = vsel %vm405, 1, 0
    %v408 = vsel %vm406, 1, 0
    %v409 = vcvt.s32.f32 %v407
    %v410 = vcvt.s32.f32 %v408
    %vm411 = vcmp.ge.s32.totalorder %v37, 3
    %vm412 = vcmp.ge.s32.totalorder %v38, 3
    %v413 = vsel %vm411, 1, 0
    %v414 = vsel %vm412, 1, 0
    %v415 = vcvt.s32.f32 %v413
    %v416 = vcvt.s32.f32 %v414
    %v417 = vadd.f32 %v409, %v415
    %v418 = vadd.f32 %v410, %v416
    %v419 = vmul.f32 %v417, 0.13533528
    %v420 = vmul.f32 %v418, 0.13533528
    %v421 = vadd.f32 %v403, %v419
    %v422 = vadd.f32 %v404, %v420
    %v423 = vmul.f32 %v109, %v421
    %v424 = vmul.f32 %v111, %v422
    %v425 = vsub.f32 %v423, %v360
    %v426 = vsub.f32 %v424, %v368
    %vm427 = vcmask 7168
    %428 = vst.msk [vmem:[%s2] sm:$0xff] %vm427, %v425
    %429 = vst.msk [vmem:[%s2 + $0x8] sm:$0xff] %vm427, %v426
    // Predicated region
    $region14: #{tpu_custom_call.1} parent=1 // pred_check
      _
    $region15: #{tpu_custom_call.1} parent=1 // pred_check_branch
      %431 = sbr.rel (0) target = $region17
    $region16: #{tpu_custom_call.1} parent=1 // pred_region
      _
    $region17: #{tpu_custom_call.1} parent=1 // pred_fallthru
      _
    // Predicated region
    $region18: #{tpu_custom_call.1} parent=1 // pred_check
      _
    $region19: #{tpu_custom_call.1} parent=1 // pred_check_branch
      %433 = sbr.rel (0) target = $region21
    $region20: #{tpu_custom_call.1} parent=1 // pred_region
      _
    $region21: #{tpu_custom_call.1} parent=1 // pred_fallthru
      _
    %434 = vsyncpa [#allocation3], 1

</llo_original>
